<compile_context>
chip_gen: v7x
topology: tpu7x:2x2x1
jax: 0.10.0
libtpu: 0.0.40
codegen_flags: <defaults>
</compile_context>

<pallas_src>
import functools

import jax
import jax.numpy as jnp
import numpy as np
from jax.experimental import pallas as pl
from jax.experimental.pallas import tpu as pltpu

NET_OUT_DIMS_PER_ACT_DIM = 5
ACTION_BINS_PER_DIM = 2 ** NET_OUT_DIMS_PER_ACT_DIM - 1  # 31
HIDDEN = 265          # rlkit Mlp(hidden_sizes=[265, 265], ...)
LANE = 128


def _round_up(x, m):
    return ((x + m - 1) // m) * m


def _default_hidden_pad():
    """512 (2x256 MXU tiles) on v6e/v7x; 384 (3x128 tiles) on v5-class/older."""
    try:
        kind = jax.devices()[0].device_kind.lower()
    except Exception:
        return 512
    return 512 if ("v6" in kind or "v7" in kind) else 384


def _rand_net_adv_kernel(x_ref, w1_ref, b1_ref, w2_ref, b2_ref, w3_ref, b3_ref,
                         wbit_ref, amin_ref, out_ref):
    # 3-layer MLP: bf16 operands, f32 MXU accumulation.
    h1 = jnp.dot(x_ref[...], w1_ref[...], preferred_element_type=jnp.float32)
    h1 = jnp.maximum(h1 + b1_ref[...], 0.0)
    h2 = jnp.dot(h1.astype(jnp.bfloat16), w2_ref[...],
                 preferred_element_type=jnp.float32)
    h2 = jnp.maximum(h2 + b2_ref[...], 0.0)
    logits = jnp.dot(h2.astype(jnp.bfloat16), w3_ref[...],
                     preferred_element_type=jnp.float32)
    logits = logits + b3_ref[...]

    # MSB-first 5-bit binary decode as a small f32 matmul against a pre-scaled
    # powers-of-two matrix; the affine rescale + min offset are already folded.
    bits = (logits > 0.0).astype(jnp.float32)
    out_ref[...] = (
        jnp.dot(bits, wbit_ref[...], preferred_element_type=jnp.float32)
        + amin_ref[...])


def init_params(key, input_size, action_size):
    """Deterministic init mimicking rlkit Mlp (fanin-uniform weights, bias=0.1).

    Weights are stored (in_features, out_features), i.e. y = x @ W + b.
    """
    out_size = NET_OUT_DIMS_PER_ACT_DIM * action_size
    k1, k2, k3 = jax.random.split(key, 3)

    def fanin(k, fan_in, fan_out):
        bound = 1.0 / np.sqrt(fan_in)
        return jax.random.uniform(k, (fan_in, fan_out), jnp.float32, -bound, bound)

    w1 = fanin(k1, input_size, HIDDEN)
    b1 = jnp.full((1, HIDDEN), 0.1, jnp.float32)
    w2 = fanin(k2, HIDDEN, HIDDEN)
    b2 = jnp.full((1, HIDDEN), 0.1, jnp.float32)
    w3 = fanin(k3, HIDDEN, out_size)
    b3 = jnp.full((1, out_size), 0.1, jnp.float32)

    # Binary-decode matrix: wbit[5j+k, j] = 2^(4-k)  (MSB first).
    wbit = np.zeros((out_size, action_size), np.float32)
    for j in range(action_size):
        for k in range(NET_OUT_DIMS_PER_ACT_DIM):
            wbit[NET_OUT_DIMS_PER_ACT_DIM * j + k, j] = 2.0 ** (
                NET_OUT_DIMS_PER_ACT_DIM - 1 - k)
    return (w1, b1, w2, b2, w3, b3, jnp.asarray(wbit))


def prepare_params(params, act_min, act_max, input_size, hidden_pad=None,
                   weight_dtype=jnp.bfloat16):
    """Pad weights to MXU/lane-friendly shapes, cast matmul weights to bf16,
    and fold the action rescale into the decode matrix.

    Padded entries are exactly 0, so the padded network is numerically
    identical on the real rows/columns.  Biases, the decode matrix and the
    min-offset stay f32 (they set the final action precision).
    """
    w1, b1, w2, b2, w3, b3, wbit = params
    if hidden_pad is None:
        hidden_pad = _default_hidden_pad()
    action_size = int(np.asarray(act_min).reshape(-1).shape[0])
    out_size = NET_OUT_DIMS_PER_ACT_DIM * action_size
    out_pad = _round_up(out_size, LANE)
    a_pad = _round_up(action_size, LANE)

    def pad2(a, rows, cols, dtype):
        a = jnp.asarray(a, dtype)
        return jnp.pad(a, ((0, rows - a.shape[0]), (0, cols - a.shape[1])))

    w1p = pad2(w1, input_size, hidden_pad, weight_dtype)   # D not lane-padded
    b1p = pad2(b1, 1, hidden_pad, jnp.float32)
    w2p = pad2(w2, hidden_pad, hidden_pad, weight_dtype)
    b2p = pad2(b2, 1, hidden_pad, jnp.float32)
    w3p = pad2(w3, hidden_pad, out_pad, weight_dtype)
    b3p = pad2(b3, 1, out_pad, jnp.float32)

    # Fold `tokens / 31 * (max - min) + min` into the decode matrix / offset.
    scale = (jnp.asarray(act_max, jnp.float32).reshape(-1)
             - jnp.asarray(act_min, jnp.float32).reshape(-1)) / ACTION_BINS_PER_DIM
    wbit_scaled = jnp.asarray(wbit, jnp.float32) * scale[None, :]
    wbitp = pad2(wbit_scaled, out_pad, a_pad, jnp.float32)
    aminp = pad2(jnp.asarray(act_min, jnp.float32).reshape(1, action_size),
                 1, a_pad, jnp.float32)
    return (w1p, b1p, w2p, b2p, w3p, b3p, wbitp, aminp)


@functools.partial(jax.jit, static_argnames=("action_size", "block_b"))
def rand_net_adv_forward(x, prepared, action_size, block_b=512):
    w1, b1, w2, b2, w3, b3, wbit, amin = prepared
    B, D = x.shape
    if D != w1.shape[0]:
        raise ValueError("x feature dim does not match prepared w1")
    a_pad = amin.shape[1]

    # Batch tiling:
    #  - large batches: block_b rows/step, grid rounded to an even number of
    #    steps so both v7x TensorCores get work; weights stay VMEM-resident.
    #  - mid-size batches (256 < B <= block_b): split into 2 steps (v7x).
    #  - small batches: single full-array block.
    b_pad = max(8, _round_up(B, 8))
    if b_pad > block_b:
        n_steps = _round_up(-(-b_pad // block_b), 2)
        tb = block_b
        b_pad = n_steps * block_b
    elif b_pad > 256:
        tb = _round_up(-(-b_pad // 2), 16)
        b_pad = 2 * tb
    else:
        tb = b_pad

    xp = x.astype(jnp.bfloat16)
    if b_pad != B:
        xp = jnp.pad(xp, ((0, b_pad - B), (0, 0)))

    def resident(shape):
        # Same block every grid step -> DMA'd once, kept resident in VMEM.
        return pl.BlockSpec(shape, lambda i: (0, 0))

    out = pl.pallas_call(
        _rand_net_adv_kernel,
        out_shape=jax.ShapeDtypeStruct((b_pad, a_pad), jnp.float32),
        grid=(b_pad // tb,),
        in_specs=[
            pl.BlockSpec((tb, D), lambda i: (i, 0)),   # last dim == full dim
            resident(w1.shape), resident(b1.shape),
            resident(w2.shape), resident(b2.shape),
            resident(w3.shape), resident(b3.shape),
            resident(wbit.shape), resident(amin.shape),
        ],
        out_specs=pl.BlockSpec((tb, a_pad), lambda i: (i, 0)),
        compiler_params=pltpu.CompilerParams(
            dimension_semantics=("parallel",),
            vmem_limit_bytes=(64 * 1024 * 1024 if tb >= 1024 else None)),
    )(xp, w1, b1, w2, b2, w3, b3, wbit, amin)
    return out[:B, :action_size]


def reference_forward(x, params, act_min, act_max):
    """Pure-JAX reference mirroring the PyTorch math at the kernel's precision
    (bf16 matmul operands, f32 accumulation)."""
    w1, b1, w2, b2, w3, b3, wbit = params

    def mm(a, b):
        return jnp.dot(a.astype(jnp.bfloat16), b.astype(jnp.bfloat16),
                       preferred_element_type=jnp.float32)

    h = jnp.maximum(mm(x, w1) + b1, 0.0)
    h = jnp.maximum(mm(h, w2) + b2, 0.0)
    out = mm(h, w3) + b3
    bits = (out > 0.0).astype(jnp.float32)
    tokens = bits @ wbit   # exact: powers of two, integer-valued result
    return tokens / ACTION_BINS_PER_DIM * (act_max - act_min) + act_min


def reference_forward_prepared(x, prepared, action_size):
    """Reference on the prepared (padded / folded / bf16) operands — used to
    validate the multi-grid-step path with matching numerics."""
    w1, b1, w2, b2, w3, b3, wbit, amin = prepared
    xb = x.astype(jnp.bfloat16)
    h1 = jnp.maximum(
        jnp.dot(xb, w1, preferred_element_type=jnp.float32) + b1, 0.0)
    h2 = jnp.maximum(
        jnp.dot(h1.astype(jnp.bfloat16), w2,
                preferred_element_type=jnp.float32) + b2, 0.0)
    logits = jnp.dot(h2.astype(jnp.bfloat16), w3,
                     preferred_element_type=jnp.float32) + b3
    bits = (logits > 0.0).astype(jnp.float32)
    # HIGHEST precision so the f32 decode matrix is not bf16-truncated by XLA.
    dec = jnp.dot(bits, wbit, preferred_element_type=jnp.float32,
                  precision=jax.lax.Precision.HIGHEST)
    return (dec + amin)[:, :action_size]


if __name__ == "__main__":
    INPUT_SIZE = 16
    ACTION_SIZE = 4
    action_space_by_dim = np.array(
        [[-1.0, 1.0], [0.0, 2.0], [-0.5, 0.5], [2.0, 4.0]], np.float32)
    act_min = jnp.asarray(action_space_by_dim.T[0]).reshape(1, ACTION_SIZE)
    act_max = jnp.asarray(action_space_by_dim.T[1]).reshape(1, ACTION_SIZE)

    key = jax.random.PRNGKey(0)
    kx, kp, kx2 = jax.random.split(key, 3)
    params = init_params(kp, INPUT_SIZE, ACTION_SIZE)
    prepared = prepare_params(params, act_min, act_max, INPUT_SIZE)

    # Small batch (grid=(1,)): validate padding + folded rescale against the
    # original-parameter reference.
    x = jax.random.normal(kx, (2, INPUT_SIZE), jnp.float32)
    actions = jax.block_until_ready(
        rand_net_adv_forward(x, prepared, action_size=ACTION_SIZE))
    ref = reference_forward(x, params, act_min, act_max)
    np.testing.assert_allclose(np.asarray(actions), np.asarray(ref),
                               rtol=1e-5, atol=1e-5)

    # Mid-size batch (grid=(2,)): exercises the multi-step / two-TensorCore
    # path; checked against a reference on the same prepared operands.
    x2 = jax.random.normal(kx2, (300, INPUT_SIZE), jnp.float32)
    actions2 = jax.block_until_ready(
        rand_net_adv_forward(x2, prepared, action_size=ACTION_SIZE))
    ref2 = reference_forward_prepared(x2, prepared, ACTION_SIZE)
    np.testing.assert_allclose(np.asarray(actions2), np.asarray(ref2),
                               rtol=1e-5, atol=1e-5)

    print("KERNEL_OK")
</pallas_src>

<mosaic_0001>
module attributes {stable_mosaic.version = 11 : i64} {
  func.func @_rand_net_adv_kernel(%arg0: i32, %arg1: memref<8x16xbf16, #tpu.memory_space<vmem>>, %arg2: memref<16x384xbf16, #tpu.memory_space<vmem>>, %arg3: memref<1x384xf32, #tpu.memory_space<vmem>>, %arg4: memref<384x384xbf16, #tpu.memory_space<vmem>>, %arg5: memref<1x384xf32, #tpu.memory_space<vmem>>, %arg6: memref<384x128xbf16, #tpu.memory_space<vmem>>, %arg7: memref<1x128xf32, #tpu.memory_space<vmem>>, %arg8: memref<128x128xf32, #tpu.memory_space<vmem>>, %arg9: memref<1x128xf32, #tpu.memory_space<vmem>>, %arg10: memref<8x128xf32, #tpu.memory_space<vmem>>) attributes {dimension_semantics = [#tpu.dimension_semantics<parallel>], iteration_bounds = array<i64: 1>, scalar_prefetch = 0 : i64, scratch_operands = 0 : i64, tpu.core_type = #tpu.core_type<tc>, window_params = [{transform_indices = @transform_0, window_bounds = array<i64: 8, 16>}, {pipeline_mode = #tpu.pipeline_mode<synchronous>, transform_indices = @transform_1, window_bounds = array<i64: 16, 384>}, {pipeline_mode = #tpu.pipeline_mode<synchronous>, transform_indices = @transform_2, window_bounds = array<i64: 1, 384>}, {pipeline_mode = #tpu.pipeline_mode<synchronous>, transform_indices = @transform_3, window_bounds = array<i64: 384, 384>}, {pipeline_mode = #tpu.pipeline_mode<synchronous>, transform_indices = @transform_4, window_bounds = array<i64: 1, 384>}, {pipeline_mode = #tpu.pipeline_mode<synchronous>, transform_indices = @transform_5, window_bounds = array<i64: 384, 128>}, {pipeline_mode = #tpu.pipeline_mode<synchronous>, transform_indices = @transform_6, window_bounds = array<i64: 1, 128>}, {pipeline_mode = #tpu.pipeline_mode<synchronous>, transform_indices = @transform_7, window_bounds = array<i64: 128, 128>}, {pipeline_mode = #tpu.pipeline_mode<synchronous>, transform_indices = @transform_8, window_bounds = array<i64: 1, 128>}, {transform_indices = @transform_9, window_bounds = array<i64: 8, 128>}]} {
    %c0 = arith.constant 0 : index
    %c0_0 = arith.constant 0 : index
    %0 = vector.load %arg1[%c0, %c0_0] : memref<8x16xbf16, #tpu.memory_space<vmem>>, vector<8x16xbf16>
    %c0_1 = arith.constant 0 : index
    %c0_2 = arith.constant 0 : index
    %1 = vector.load %arg2[%c0_1, %c0_2] : memref<16x384xbf16, #tpu.memory_space<vmem>>, vector<16x384xbf16>
    %cst = arith.constant dense<0.000000e+00> : vector<8x384xf32>
    %2 = tpu.matmul %0, %1, %cst {dimension_numbers = #tpu.dot_dimension_numbers<[1], [0], [0], [1], [0, 0, 1, 1], [], []>} : vector<8x16xbf16>, vector<16x384xbf16>, vector<8x384xf32> -> vector<8x384xf32>
    %c0_3 = arith.constant 0 : index
    %c0_4 = arith.constant 0 : index
    %3 = vector.load %arg3[%c0_3, %c0_4] : memref<1x384xf32, #tpu.memory_space<vmem>>, vector<1x384xf32>
    %4 = vector.broadcast %3 : vector<1x384xf32> to vector<8x384xf32>
    %5 = arith.addf %2, %4 : vector<8x384xf32>
    %cst_5 = arith.constant 0.000000e+00 : f32
    %6 = vector.broadcast %cst_5 : f32 to vector<8x384xf32>
    %7 = arith.maximumf %5, %6 : vector<8x384xf32>
    %8 = arith.truncf %7 : vector<8x384xf32> to vector<8x384xbf16>
    %c0_6 = arith.constant 0 : index
    %c0_7 = arith.constant 0 : index
    %9 = vector.load %arg4[%c0_6, %c0_7] : memref<384x384xbf16, #tpu.memory_space<vmem>>, vector<384x384xbf16>
    %cst_8 = arith.constant dense<0.000000e+00> : vector<8x384xf32>
    %10 = tpu.matmul %8, %9, %cst_8 {dimension_numbers = #tpu.dot_dimension_numbers<[1], [0], [0], [1], [0, 0, 1, 1], [], []>} : vector<8x384xbf16>, vector<384x384xbf16>, vector<8x384xf32> -> vector<8x384xf32>
    %c0_9 = arith.constant 0 : index
    %c0_10 = arith.constant 0 : index
    %11 = vector.load %arg5[%c0_9, %c0_10] : memref<1x384xf32, #tpu.memory_space<vmem>>, vector<1x384xf32>
    %12 = vector.broadcast %11 : vector<1x384xf32> to vector<8x384xf32>
    %13 = arith.addf %10, %12 : vector<8x384xf32>
    %cst_11 = arith.constant 0.000000e+00 : f32
    %14 = vector.broadcast %cst_11 : f32 to vector<8x384xf32>
    %15 = arith.maximumf %13, %14 : vector<8x384xf32>
    %16 = arith.truncf %15 : vector<8x384xf32> to vector<8x384xbf16>
    %c0_12 = arith.constant 0 : index
    %c0_13 = arith.constant 0 : index
    %17 = vector.load %arg6[%c0_12, %c0_13] : memref<384x128xbf16, #tpu.memory_space<vmem>>, vector<384x128xbf16>
    %cst_14 = arith.constant dense<0.000000e+00> : vector<8x128xf32>
    %18 = tpu.matmul %16, %17, %cst_14 {dimension_numbers = #tpu.dot_dimension_numbers<[1], [0], [0], [1], [0, 0, 1, 1], [], []>} : vector<8x384xbf16>, vector<384x128xbf16>, vector<8x128xf32> -> vector<8x128xf32>
    %c0_15 = arith.constant 0 : index
    %c0_16 = arith.constant 0 : index
    %19 = vector.load %arg7[%c0_15, %c0_16] : memref<1x128xf32, #tpu.memory_space<vmem>>, vector<1x128xf32>
    %20 = vector.broadcast %19 : vector<1x128xf32> to vector<8x128xf32>
    %21 = arith.addf %18, %20 : vector<8x128xf32>
    %cst_17 = arith.constant 0.000000e+00 : f32
    %22 = vector.broadcast %cst_17 : f32 to vector<8x128xf32>
    %23 = arith.cmpf ogt, %21, %22 : vector<8x128xf32>
    %24 = arith.extui %23 : vector<8x128xi1> to vector<8x128xi32>
    %25 = arith.sitofp %24 : vector<8x128xi32> to vector<8x128xf32>
    %c0_18 = arith.constant 0 : index
    %c0_19 = arith.constant 0 : index
    %26 = vector.load %arg8[%c0_18, %c0_19] : memref<128x128xf32, #tpu.memory_space<vmem>>, vector<128x128xf32>
    %cst_20 = arith.constant dense<0.000000e+00> : vector<8x128xf32>
    %27 = tpu.matmul %25, %26, %cst_20 {dimension_numbers = #tpu.dot_dimension_numbers<[1], [0], [0], [1], [0, 0, 1, 1], [], []>} : vector<8x128xf32>, vector<128x128xf32>, vector<8x128xf32> -> vector<8x128xf32>
    %c0_21 = arith.constant 0 : index
    %c0_22 = arith.constant 0 : index
    %28 = vector.load %arg9[%c0_21, %c0_22] : memref<1x128xf32, #tpu.memory_space<vmem>>, vector<1x128xf32>
    %29 = vector.broadcast %28 : vector<1x128xf32> to vector<8x128xf32>
    %30 = arith.addf %27, %29 : vector<8x128xf32>
    %c0_23 = arith.constant 0 : index
    %c0_24 = arith.constant 0 : index
    %31 = vector.load %arg10[%c0_23, %c0_24] : memref<8x128xf32, #tpu.memory_space<vmem>>, vector<8x128xf32>
    tpu.vector_store %arg10[%c0_23, %c0_24], %30 {strides = array<i32>} : memref<8x128xf32, #tpu.memory_space<vmem>>, vector<8x128xf32>,
    return
  }
  func.func @transform_0(%arg0: i32) -> (i32, i32) {
    %c0_i32 = arith.constant 0 : i32
    %c0_i32_0 = arith.constant 0 : i32
    return %arg0, %c0_i32 : i32, i32
  }
  func.func @transform_1(%arg0: i32) -> (i32, i32) {
    %c0_i32 = arith.constant 0 : i32
    %c0_i32_0 = arith.constant 0 : i32
    %c0_i32_1 = arith.constant 0 : i32
    return %c0_i32, %c0_i32_0 : i32, i32
  }
  func.func @transform_2(%arg0: i32) -> (i32, i32) {
    %c0_i32 = arith.constant 0 : i32
    %c0_i32_0 = arith.constant 0 : i32
    %c0_i32_1 = arith.constant 0 : i32
    return %c0_i32, %c0_i32_0 : i32, i32
  }
  func.func @transform_3(%arg0: i32) -> (i32, i32) {
    %c0_i32 = arith.constant 0 : i32
    %c0_i32_0 = arith.constant 0 : i32
    %c0_i32_1 = arith.constant 0 : i32
    return %c0_i32, %c0_i32_0 : i32, i32
  }
  func.func @transform_4(%arg0: i32) -> (i32, i32) {
    %c0_i32 = arith.constant 0 : i32
    %c0_i32_0 = arith.constant 0 : i32
    %c0_i32_1 = arith.constant 0 : i32
    return %c0_i32, %c0_i32_0 : i32, i32
  }
  func.func @transform_5(%arg0: i32) -> (i32, i32) {
    %c0_i32 = arith.constant 0 : i32
    %c0_i32_0 = arith.constant 0 : i32
    %c0_i32_1 = arith.constant 0 : i32
    return %c0_i32, %c0_i32_0 : i32, i32
  }
  func.func @transform_6(%arg0: i32) -> (i32, i32) {
    %c0_i32 = arith.constant 0 : i32
    %c0_i32_0 = arith.constant 0 : i32
    %c0_i32_1 = arith.constant 0 : i32
    return %c0_i32, %c0_i32_0 : i32, i32
  }
  func.func @transform_7(%arg0: i32) -> (i32, i32) {
    %c0_i32 = arith.constant 0 : i32
    %c0_i32_0 = arith.constant 0 : i32
    %c0_i32_1 = arith.constant 0 : i32
    return %c0_i32, %c0_i32_0 : i32, i32
  }
  func.func @transform_8(%arg0: i32) -> (i32, i32) {
    %c0_i32 = arith.constant 0 : i32
    %c0_i32_0 = arith.constant 0 : i32
    %c0_i32_1 = arith.constant 0 : i32
    return %c0_i32, %c0_i32_0 : i32, i32
  }
  func.func @transform_9(%arg0: i32) -> (i32, i32) {
    %c0_i32 = arith.constant 0 : i32
    %c0_i32_0 = arith.constant 0 : i32
    return %arg0, %c0_i32 : i32, i32
  }
}

</mosaic_0001>

<llo_original>
// kernel: rand_net_adv_forward.1
$region0: #{rand_net_adv_forward.1}
  #allocation0 [shape = 'u32[]', space=smem, size = 0x4, offset = 0x4, fixed_abs, tag = 'smem constant byte address 0x4 - core index']
  #allocation1 [shape = 'u32[144,128]{1,0:T(1,128)}', space=vmem, size = 0x12000, scoped, tag = 'internal scratch']
  %s0 = inlined_call_operand.vmem [shape: bf16[8,16], index: 0, kind: input, shape index: {}]
  %s1 = inlined_call_operand.hbm [shape: bf16[16,384], index: 1, kind: input, shape index: {}]
  %s2 = inlined_call_operand.vmem [shape: f32[1,384], index: 2, kind: input, shape index: {}]
  %s3 = inlined_call_operand.hbm [shape: bf16[384,384], index: 3, kind: input, shape index: {}]
  %s4 = inlined_call_operand.vmem [shape: f32[1,384], index: 4, kind: input, shape index: {}]
  %s5 = inlined_call_operand.hbm [shape: bf16[384,128], index: 5, kind: input, shape index: {}]
  %s6 = inlined_call_operand.vmem [shape: f32[1,128], index: 6, kind: input, shape index: {}]
  %s7 = inlined_call_operand.hbm [shape: f32[128,128], index: 7, kind: input, shape index: {}]
  %s8 = inlined_call_operand.vmem [shape: f32[1,128], index: 8, kind: input, shape index: {}]
  %s9 = inlined_call_operand.vmem [shape: f32[8,128], index: 9, kind: output, shape index: {}]
  %s10 = sld [smem:[#allocation0]]
  $region62: #{rand_net_adv_forward.1} parent=0
    _
  %s12 = ssub.s32 1, %s10
  %s13 = scalar_select 0, %s12, %s10
  $region1: #{rand_net_adv_forward.1} parent=0
    #allocation2 [shape = 'u8[12288]{0}', space=vmem, size = 0x3000, scoped, tag = 'input window, operand 1, single buffered']
    #allocation3 [shape = 's32[1]{0}', space=sflag, size = 0x4, scoped, tag = 'scoped memory for rand_net_adv_forward.1']
    #allocation4 [shape = 'u8[294912]{0}', space=vmem, size = 0x48000, scoped, tag = 'input window, operand 3, single buffered']
    #allocation5 [shape = 's32[1]{0}', space=sflag, size = 0x4, scoped, tag = 'scoped memory for rand_net_adv_forward.1']
    #allocation6 [shape = 'u8[98304]{0}', space=vmem, size = 0x18000, scoped, tag = 'input window, operand 5, single buffered']
    #allocation7 [shape = 'u8[65536]{0}', space=vmem, size = 0x10000, scoped, tag = 'input window, operand 7, single buffered']
    #allocation8 [shape = 's32[1]{0}', space=sflag, size = 0x4, scoped, tag = 'scoped memory for rand_net_adv_forward.1']
    %14 = vsyncpa [#allocation3], 0
    %15 = vsyncpa [#allocation5], 0
    %16 = vsyncpa [#allocation8], 0
    // Predicated region
    $region2: #{rand_net_adv_forward.1} parent=1 // pred_check
      _
    $region3: #{rand_net_adv_forward.1} parent=1 // pred_check_branch
      %18 = sbr.rel (0) target = $region5
    $region4: #{rand_net_adv_forward.1} parent=1 // pred_region
      _
    $region5: #{rand_net_adv_forward.1} parent=1 // pred_fallthru
      _
    // Predicated region
    $region6: #{rand_net_adv_forward.1} parent=1 // pred_check
      _
    $region7: #{rand_net_adv_forward.1} parent=1 // pred_check_branch
      %20 = sbr.rel (0) target = $region9
    $region8: #{rand_net_adv_forward.1} parent=1 // pred_region
      %s22 = ssub.s32 384, 384
      %23 = vsyncadd [#allocation3], %s22
      %s24 = sshll.u32 [#allocation2], 4
      %s25 = int_to_ptr.vmem [resolvable:$true] %s24
      %30 = dma.hbm_to_vmem [thread:$0]  %s1, 384, %s25, [#allocation3], 192, 192, 12
    $region9: #{rand_net_adv_forward.1} parent=1 // pred_fallthru
      _
    // Predicated region
    $region10: #{rand_net_adv_forward.1} parent=1 // pred_check
      _
    $region11: #{rand_net_adv_forward.1} parent=1 // pred_check_branch
      %32 = sbr.rel (0) target = $region13
    $region12: #{rand_net_adv_forward.1} parent=1 // pred_region
      _
    $region13: #{rand_net_adv_forward.1} parent=1 // pred_fallthru
      _
    // Predicated region
    $region14: #{rand_net_adv_forward.1} parent=1 // pred_check
      _
    $region15: #{rand_net_adv_forward.1} parent=1 // pred_check_branch
      %34 = sbr.rel (0) target = $region17
    $region16: #{rand_net_adv_forward.1} parent=1 // pred_region
      %s36 = ssub.s32 9216, 9216
      %37 = vsyncadd [#allocation5], %s36
      %s38 = sshll.u32 [#allocation4], 4
      %s39 = int_to_ptr.vmem [resolvable:$true] %s38
      %44 = dma.hbm_to_vmem [thread:$0]  %s3, 9216, %s39, [#allocation5], 192, 192, 12
    $region17: #{rand_net_adv_forward.1} parent=1 // pred_fallthru
      _
    // Predicated region
    $region18: #{rand_net_adv_forward.1} parent=1 // pred_check
      _
    $region19: #{rand_net_adv_forward.1} parent=1 // pred_check_branch
      %46 = sbr.rel (0) target = $region21
    $region20: #{rand_net_adv_forward.1} parent=1 // pred_region
      _
    $region21: #{rand_net_adv_forward.1} parent=1 // pred_fallthru
      _
    // Predicated region
    $region22: #{rand_net_adv_forward.1} parent=1 // pred_check
      _
    $region23: #{rand_net_adv_forward.1} parent=1 // pred_check_branch
      %48 = sbr.rel (0) target = $region25
    $region24: #{rand_net_adv_forward.1} parent=1 // pred_region
      %s50 = ssub.s32 3072, 3072
      %51 = vsyncadd [#allocation5], %s50
      %s52 = sshll.u32 [#allocation6], 4
      %s53 = int_to_ptr.vmem [resolvable:$true] %s52
      %58 = dma.hbm_to_vmem [thread:$0]  %s5, 3072, %s53, [#allocation5], 64, 64, 4
    $region25: #{rand_net_adv_forward.1} parent=1 // pred_fallthru
      _
    // Predicated region
    $region26: #{rand_net_adv_forward.1} parent=1 // pred_check
      _
    $region27: #{rand_net_adv_forward.1} parent=1 // pred_check_branch
      %60 = sbr.rel (0) target = $region29
    $region28: #{rand_net_adv_forward.1} parent=1 // pred_region
      _
    $region29: #{rand_net_adv_forward.1} parent=1 // pred_fallthru
      _
    // Predicated region
    $region30: #{rand_net_adv_forward.1} parent=1 // pred_check
      _
    $region31: #{rand_net_adv_forward.1} parent=1 // pred_check_branch
      %62 = sbr.rel (0) target = $region33
    $region32: #{rand_net_adv_forward.1} parent=1 // pred_region
      %s64 = ssub.s32 2048, 2048
      %65 = vsyncadd [#allocation8], %s64
      %s66 = sshll.u32 [#allocation7], 4
      %s67 = int_to_ptr.vmem [resolvable:$true] %s66
      %72 = dma.hbm_to_vmem [thread:$0]  %s7, 2048, %s67, [#allocation8], 128, 128, 8
    $region33: #{rand_net_adv_forward.1} parent=1 // pred_fallthru
      _
    // Predicated region
    $region34: #{rand_net_adv_forward.1} parent=1 // pred_check
      _
    $region35: #{rand_net_adv_forward.1} parent=1 // pred_check_branch
      %74 = sbr.rel (0) target = $region37
    $region36: #{rand_net_adv_forward.1} parent=1 // pred_region
      _
    $region37: #{rand_net_adv_forward.1} parent=1 // pred_fallthru
      _
    // Predicated region
    $region38: #{rand_net_adv_forward.1} parent=1 // pred_check
      _
    $region39: #{rand_net_adv_forward.1} parent=1 // pred_check_branch
      %76 = sbr.rel (0) target = $region41
    $region40: #{rand_net_adv_forward.1} parent=1 // pred_region
      %77 = dma.done [#allocation3], 384
    $region41: #{rand_net_adv_forward.1} parent=1 // pred_fallthru
      _
    // Predicated region
    $region42: #{rand_net_adv_forward.1} parent=1 // pred_check
      _
    $region43: #{rand_net_adv_forward.1} parent=1 // pred_check_branch
      %79 = sbr.rel (0) target = $region45
    $region44: #{rand_net_adv_forward.1} parent=1 // pred_region
      %80 = dma.done [#allocation5], 9216
    $region45: #{rand_net_adv_forward.1} parent=1 // pred_fallthru
      _
    // Predicated region
    $region46: #{rand_net_adv_forward.1} parent=1 // pred_check
      _
    $region47: #{rand_net_adv_forward.1} parent=1 // pred_check_branch
      %82 = sbr.rel (0) target = $region49
    $region48: #{rand_net_adv_forward.1} parent=1 // pred_region
      %83 = dma.done [#allocation5], 3072
    $region49: #{rand_net_adv_forward.1} parent=1 // pred_fallthru
      _
    // Predicated region
    $region50: #{rand_net_adv_forward.1} parent=1 // pred_check
      _
    $region51: #{rand_net_adv_forward.1} parent=1 // pred_check_branch
      %85 = sbr.rel (0) target = $region53
    $region52: #{rand_net_adv_forward.1} parent=1 // pred_region
      %86 = dma.done [#allocation8], 2048
    $region53: #{rand_net_adv_forward.1} parent=1 // pred_fallthru
      _
    %v88 = vld [vmem:[%s0] sm:$0xf]
    %v89 = vld [vmem:[#allocation2] sm:$0xff]
    %v90 = vld [vmem:[#allocation2 + $0x8] sm:$0xf]
    %v91 = vld [vmem:[#allocation2 + $0xc] sm:$0xff]
    %v92 = vld [vmem:[#allocation2 + $0x14] sm:$0xf]
    %v93 = vld [vmem:[%s2] sm:$0x7]
    %v95 = vlaneseq
    %v96 = vshrl.u32 %v95, 7
    %v97 = vsub.s32 0, %v96
    %v98 = vrot.slane %v93, %v97
    %v99 = vlaneseq
    %v100 = vshrl.u32 %v99, 7
    %v101 = vsub.s32 1, %v100
    %v102 = vrot.slane %v93, %v101
    %v103 = vlaneseq
    %v104 = vshrl.u32 %v103, 7
    %v105 = vsub.s32 2, %v104
    %v106 = vrot.slane %v93, %v105
    %v114 = vunpack.c.l.b16 %v89
    %v115 = vunpack.c.h.b16 %v89
    %v116 = vunpack.c.l.b16 %v90
    %v117 = vunpack.c.l.b16 %v91
    %v118 = vunpack.c.h.b16 %v91
    %v119 = vunpack.c.l.b16 %v92
    %v120 = vpack.c.b16 %v117, %v114
    %v121 = vpack.c.b16 %v118, %v115
    %v122 = vpack.c.b16 %v119, %v116
    %vm126 = vcmask 130048
    %v128 = vsel %vm126, %v88, 0
    %130 = vmatprep.subr.bf16.mxu0 %v121
    %131 = vmatpush1.bf16.msra.mxu0 %v120
    %132 = vmatprep.subr.bf16.mxu0 0
    %133 = vmatpush1.bf16.msra.mxu0 0
    %134 = vmatprep.subr.bf16.mxu0 0
    %135 = vmatpush1.bf16.msra.mxu0 0
    %136 = vmatprep.subr.bf16.mxu0 0
    %137 = vmatpush1.bf16.msra.mxu0 0
    %138 = vmatprep.subr.bf16.mxu0 0
    %139 = vmatpush1.bf16.msra.mxu0 0
    %140 = vmatprep.subr.bf16.mxu0 0
    %141 = vmatpush1.bf16.msra.mxu0 0
    %142 = vmatprep.subr.bf16.mxu0 0
    %143 = vmatpush1.bf16.msra.mxu0 0
    %144 = vmatprep.subr.bf16.mxu0 0
    %145 = vmatpush1.bf16.msra.mxu0 0
    %146 = vmatprep.subr.bf16.mxu0 0
    %147 = vmatpush1.bf16.msra.mxu0 0
    %148 = vmatprep.subr.bf16.mxu0 0
    %149 = vmatpush1.bf16.msra.mxu0 0
    %150 = vmatprep.subr.bf16.mxu0 0
    %151 = vmatpush1.bf16.msra.mxu0 0
    %152 = vmatprep.subr.bf16.mxu0 0
    %153 = vmatpush1.bf16.msra.mxu0 0
    %154 = vmatprep.subr.bf16.mxu0 0
    %155 = vmatpush1.bf16.msra.mxu0 0
    %156 = vmatprep.subr.bf16.mxu0 0
    %157 = vmatpush1.bf16.msra.mxu0 0
    %158 = vmatprep.subr.bf16.mxu0 0
    %159 = vmatpush1.bf16.msra.mxu0 0
    %160 = vmatprep.subr.bf16.mxu0 0
    %161 = vmatpush1.bf16.msra.mxu0 0
    %162 = vmatprep.mubr.bf16.mxu0 0
    %163 = vmatmul.mubr.bf16.gmra.mrb[0].mxu0 %v128
    %v164 = vpop.f32.mrb[0].mxu0
    %v165 = vadd.f32 %v98, %v164
    %v166 = vpop.f32.mrb[0].mxu0
    %v167 = vadd.f32 %v102, %v166
    %v168 = vpop.f32.mrb[0].mxu0
    %v169 = vpop.f32.mrb[0].mxu0
    %170 = vdwg.mxu0
    %171 = vmatprep.subr.bf16.mxu0 0
    %172 = vmatpush1.bf16.msra.mxu0 %v122
    %173 = vmatprep.subr.bf16.mxu0 0
    %174 = vmatpush1.bf16.msra.mxu0 0
    %175 = vmatprep.subr.bf16.mxu0 0
    %176 = vmatpush1.bf16.msra.mxu0 0
    %177 = vmatprep.subr.bf16.mxu0 0
    %178 = vmatpush1.bf16.msra.mxu0 0
    %179 = vmatprep.subr.bf16.mxu0 0
    %180 = vmatpush1.bf16.msra.mxu0 0
    %181 = vmatprep.subr.bf16.mxu0 0
    %182 = vmatpush1.bf16.msra.mxu0 0
    %183 = vmatprep.subr.bf16.mxu0 0
    %184 = vmatpush1.bf16.msra.mxu0 0
    %185 = vmatprep.subr.bf16.mxu0 0
    %186 = vmatpush1.bf16.msra.mxu0 0
    %187 = vmatprep.subr.bf16.mxu0 0
    %188 = vmatpush1.bf16.msra.mxu0 0
    %189 = vmatprep.subr.bf16.mxu0 0
    %190 = vmatpush1.bf16.msra.mxu0 0
    %191 = vmatprep.subr.bf16.mxu0 0
    %192 = vmatpush1.bf16.msra.mxu0 0
    %193 = vmatprep.subr.bf16.mxu0 0
    %194 = vmatpush1.bf16.msra.mxu0 0
    %195 = vmatprep.subr.bf16.mxu0 0
    %196 = vmatpush1.bf16.msra.mxu0 0
    %197 = vmatprep.subr.bf16.mxu0 0
    %198 = vmatpush1.bf16.msra.mxu0 0
    %199 = vmatprep.subr.bf16.mxu0 0
    %200 = vmatpush1.bf16.msra.mxu0 0
    %201 = vmatprep.subr.bf16.mxu0 0
    %202 = vmatpush1.bf16.msra.mxu0 0
    %203 = vmatprep.mubr.bf16.mxu0 0
    %204 = vmatmul.mubr.bf16.gmra.mrb[0].mxu0 %v128
    %v205 = vpop.f32.mrb[0].mxu0
    %v206 = vadd.f32 %v106, %v205
    %v207 = vpop.f32.mrb[0].mxu0
    %v208 = vpop.f32.mrb[0].mxu0
    %v209 = vpop.f32.mrb[0].mxu0
    %210 = vdwg.mxu0
    %v211 = vmax.f32 %v165, 0.0
    %v212 = vmax.f32 %v167, 0.0
    %v213 = vmax.f32 %v206, 0.0
    %v214 = vpack.c.bf16 %v211, %v211
    %v215 = vpack.c.bf16 %v212, %v212
    %v216 = vpack.c.bf16 %v213, %v213
    %v217 = vld [vmem:[#allocation4] sm:$0xff]
    %v218 = vld [vmem:[#allocation4 + $0x8] sm:$0xf]
    %v219 = vld [vmem:[#allocation4 + $0xc] sm:$0xff]
    %v220 = vld [vmem:[#allocation4 + $0x14] sm:$0xf]
    %v221 = vld [vmem:[#allocation4 + $0x18] sm:$0xff]
    %v222 = vld [vmem:[#allocation4 + $0x20] sm:$0xf]
    %v223 = vld [vmem:[#allocation4 + $0x24] sm:$0xff]
    %v224 = vld [vmem:[#allocation4 + $0x2c] sm:$0xf]
    %v225 = vld [vmem:[#allocation4 + $0x30] sm:$0xff]
    %v226 = vld [vmem:[#allocation4 + $0x38] sm:$0xf]
    %v227 = vld [vmem:[#allocation4 + $0x3c] sm:$0xff]
    %v228 = vld [vmem:[#allocation4 + $0x44] sm:$0xf]
    %v229 = vld [vmem:[#allocation4 + $0x48] sm:$0xff]
    %v230 = vld [vmem:[#allocation4 + $0x50] sm:$0xf]
    %v231 = vld [vmem:[#allocation4 + $0x54] sm:$0xff]
    %v232 = vld [vmem:[#allocation4 + $0x5c] sm:$0xf]
    %v233 = vld [vmem:[#allocation4 + $0x60] sm:$0xff]
    %v234 = vld [vmem:[#allocation4 + $0x68] sm:$0xf]
    %v235 = vld [vmem:[#allocation4 + $0x6c] sm:$0xff]
    %v236 = vld [vmem:[#allocation4 + $0x74] sm:$0xf]
    %v237 = vld [vmem:[#allocation4 + $0x78] sm:$0xff]
    %v238 = vld [vmem:[#allocation4 + $0x80] sm:$0xf]
    %v239 = vld [vmem:[#allocation4 + $0x84] sm:$0xff]
    %v240 = vld [vmem:[#allocation4 + $0x8c] sm:$0xf]
    %v241 = vld [vmem:[#allocation4 + $0x90] sm:$0xff]
    %v242 = vld [vmem:[#allocation4 + $0x98] sm:$0xf]
    %v243 = vld [vmem:[#allocation4 + $0x9c] sm:$0xff]
    %v244 = vld [vmem:[#allocation4 + $0xa4] sm:$0xf]
    %v245 = vld [vmem:[#allocation4 + $0xa8] sm:$0xff]
    %v246 = vld [vmem:[#allocation4 + $0xb0] sm:$0xf]
    %v247 = vld [vmem:[#allocation4 + $0xb4] sm:$0xff]
    %v248 = vld [vmem:[#allocation4 + $0xbc] sm:$0xf]
    %v249 = vld [vmem:[#allocation4 + $0xc0] sm:$0xff]
    %v250 = vld [vmem:[#allocation4 + $0xc8] sm:$0xf]
    %v251 = vld [vmem:[#allocation4 + $0xcc] sm:$0xff]
    %v252 = vld [vmem:[#allocation4 + $0xd4] sm:$0xf]
    %v253 = vld [vmem:[#allocation4 + $0xd8] sm:$0xff]
    %v254 = vld [vmem:[#allocation4 + $0xe0] sm:$0xf]
    %v255 = vld [vmem:[#allocation4 + $0xe4] sm:$0xff]
    %v256 = vld [vmem:[#allocation4 + $0xec] sm:$0xf]
    %v257 = vld [vmem:[#allocation4 + $0xf0] sm:$0xff]
    %v258 = vld [vmem:[#allocation4 + $0xf8] sm:$0xf]
    %v259 = vld [vmem:[#allocation4 + $0xfc] sm:$0xff]
    %v260 = vld [vmem:[#allocation4 + $0x104] sm:$0xf]
    %v261 = vld [vmem:[#allocation4 + $0x108] sm:$0xff]
    %v262 = vld [vmem:[#allocation4 + $0x110] sm:$0xf]
    %v263 = vld [vmem:[#allocation4 + $0x114] sm:$0xff]
    %v264 = vld [vmem:[#allocation4 + $0x11c] sm:$0xf]
    %v265 = vld [vmem:[#allocation4 + $0x120] sm:$0xff]
    %v266 = vld [vmem:[#allocation4 + $0x128] sm:$0xf]
    %v267 = vld [vmem:[#allocation4 + $0x12c] sm:$0xff]
    %v268 = vld [vmem:[#allocation4 + $0x134] sm:$0xf]
    %v269 = vld [vmem:[#allocation4 + $0x138] sm:$0xff]
    %v270 = vld [vmem:[#allocation4 + $0x140] sm:$0xf]
    %v271 = vld [vmem:[#allocation4 + $0x144] sm:$0xff]
    %v272 = vld [vmem:[#allocation4 + $0x14c] sm:$0xf]
    %v273 = vld [vmem:[#allocation4 + $0x150] sm:$0xff]
    %v274 = vld [vmem:[#allocation4 + $0x158] sm:$0xf]
    %v275 = vld [vmem:[#allocation4 + $0x15c] sm:$0xff]
    %v276 = vld [vmem:[#allocation4 + $0x164] sm:$0xf]
    %v277 = vld [vmem:[#allocation4 + $0x168] sm:$0xff]
    %v278 = vld [vmem:[#allocation4 + $0x170] sm:$0xf]
    %v279 = vld [vmem:[#allocation4 + $0x174] sm:$0xff]
    %v280 = vld [vmem:[#allocation4 + $0x17c] sm:$0xf]
    %v281 = vld [vmem:[#allocation4 + $0x180] sm:$0xff]
    %v282 = vld [vmem:[#allocation4 + $0x188] sm:$0xf]
    %v283 = vld [vmem:[#allocation4 + $0x18c] sm:$0xff]
    %v284 = vld [vmem:[#allocation4 + $0x194] sm:$0xf]
    %v285 = vld [vmem:[#allocation4 + $0x198] sm:$0xff]
    %v286 = vld [vmem:[#allocation4 + $0x1a0] sm:$0xf]
    %v287 = vld [vmem:[#allocation4 + $0x1a4] sm:$0xff]
    %v288 = vld [vmem:[#allocation4 + $0x1ac] sm:$0xf]
    %v289 = vld [vmem:[#allocation4 + $0x1b0] sm:$0xff]
    %v290 = vld [vmem:[#allocation4 + $0x1b8] sm:$0xf]
    %v291 = vld [vmem:[#allocation4 + $0x1bc] sm:$0xff]
    %v292 = vld [vmem:[#allocation4 + $0x1c4] sm:$0xf]
    %v293 = vld [vmem:[#allocation4 + $0x1c8] sm:$0xff]
    %v294 = vld [vmem:[#allocation4 + $0x1d0] sm:$0xf]
    %v295 = vld [vmem:[#allocation4 + $0x1d4] sm:$0xff]
    %v296 = vld [vmem:[#allocation4 + $0x1dc] sm:$0xf]
    %v297 = vld [vmem:[#allocation4 + $0x1e0] sm:$0xff]
    %v298 = vld [vmem:[#allocation4 + $0x1e8] sm:$0xf]
    %v299 = vld [vmem:[#allocation4 + $0x1ec] sm:$0xff]
    %v300 = vld [vmem:[#allocation4 + $0x1f4] sm:$0xf]
    %v301 = vld [vmem:[#allocation4 + $0x1f8] sm:$0xff]
    %v302 = vld [vmem:[#allocation4 + $0x200] sm:$0xf]
    %v303 = vld [vmem:[#allocation4 + $0x204] sm:$0xff]
    %v304 = vld [vmem:[#allocation4 + $0x20c] sm:$0xf]
    %v305 = vld [vmem:[#allocation4 + $0x210] sm:$0xff]
    %v306 = vld [vmem:[#allocation4 + $0x218] sm:$0xf]
    %v307 = vld [vmem:[#allocation4 + $0x21c] sm:$0xff]
    %v308 = vld [vmem:[#allocation4 + $0x224] sm:$0xf]
    %v309 = vld [vmem:[#allocation4 + $0x228] sm:$0xff]
    %v310 = vld [vmem:[#allocation4 + $0x230] sm:$0xf]
    %v311 = vld [vmem:[#allocation4 + $0x234] sm:$0xff]
    %v312 = vld [vmem:[#allocation4 + $0x23c] sm:$0xf]
    %v313 = vld [vmem:[%s4] sm:$0x7]
    %v315 = vlaneseq
    %v316 = vshrl.u32 %v315, 7
    %v317 = vsub.s32 0, %v316
    %v318 = vrot.slane %v313, %v317
    %v319 = vlaneseq
    %v320 = vshrl.u32 %v319, 7
    %v321 = vsub.s32 1, %v320
    %v322 = vrot.slane %v313, %v321
    %v323 = vlaneseq
    %v324 = vshrl.u32 %v323, 7
    %v325 = vsub.s32 2, %v324
    %v326 = vrot.slane %v313, %v325
    %v426 = vunpack.c.l.b16 %v217
    %v427 = vunpack.c.h.b16 %v217
    %v428 = vunpack.c.l.b16 %v218
    %v429 = vunpack.c.l.b16 %v219
    %v430 = vunpack.c.h.b16 %v219
    %v431 = vunpack.c.l.b16 %v220
    %v432 = vunpack.c.l.b16 %v221
    %v433 = vunpack.c.h.b16 %v221
    %v434 = vunpack.c.l.b16 %v222
    %v435 = vunpack.c.l.b16 %v223
    %v436 = vunpack.c.h.b16 %v223
    %v437 = vunpack.c.l.b16 %v224
    %v438 = vunpack.c.l.b16 %v225
    %v439 = vunpack.c.h.b16 %v225
    %v440 = vunpack.c.l.b16 %v226
    %v441 = vunpack.c.l.b16 %v227
    %v442 = vunpack.c.h.b16 %v227
    %v443 = vunpack.c.l.b16 %v228
    %v444 = vunpack.c.l.b16 %v229
    %v445 = vunpack.c.h.b16 %v229
    %v446 = vunpack.c.l.b16 %v230
    %v447 = vunpack.c.l.b16 %v231
    %v448 = vunpack.c.h.b16 %v231
    %v449 = vunpack.c.l.b16 %v232
    %v450 = vunpack.c.l.b16 %v233
    %v451 = vunpack.c.h.b16 %v233
    %v452 = vunpack.c.l.b16 %v234
    %v453 = vunpack.c.l.b16 %v235
    %v454 = vunpack.c.h.b16 %v235
    %v455 = vunpack.c.l.b16 %v236
    %v456 = vunpack.c.l.b16 %v237
    %v457 = vunpack.c.h.b16 %v237
    %v458 = vunpack.c.l.b16 %v238
    %v459 = vunpack.c.l.b16 %v239
    %v460 = vunpack.c.h.b16 %v239
    %v461 = vunpack.c.l.b16 %v240
    %v462 = vunpack.c.l.b16 %v241
    %v463 = vunpack.c.h.b16 %v241
    %v464 = vunpack.c.l.b16 %v242
    %v465 = vunpack.c.l.b16 %v243
    %v466 = vunpack.c.h.b16 %v243
    %v467 = vunpack.c.l.b16 %v244
    %v468 = vunpack.c.l.b16 %v245
    %v469 = vunpack.c.h.b16 %v245
    %v470 = vunpack.c.l.b16 %v246
    %v471 = vunpack.c.l.b16 %v247
    %v472 = vunpack.c.h.b16 %v247
    %v473 = vunpack.c.l.b16 %v248
    %v474 = vunpack.c.l.b16 %v249
    %v475 = vunpack.c.h.b16 %v249
    %v476 = vunpack.c.l.b16 %v250
    %v477 = vunpack.c.l.b16 %v251
    %v478 = vunpack.c.h.b16 %v251
    %v479 = vunpack.c.l.b16 %v252
    %v480 = vunpack.c.l.b16 %v253
    %v481 = vunpack.c.h.b16 %v253
    %v482 = vunpack.c.l.b16 %v254
    %v483 = vunpack.c.l.b16 %v255
    %v484 = vunpack.c.h.b16 %v255
    %v485 = vunpack.c.l.b16 %v256
    %v486 = vunpack.c.l.b16 %v257
    %v487 = vunpack.c.h.b16 %v257
    %v488 = vunpack.c.l.b16 %v258
    %v489 = vunpack.c.l.b16 %v259
    %v490 = vunpack.c.h.b16 %v259
    %v491 = vunpack.c.l.b16 %v260
    %v492 = vunpack.c.l.b16 %v261
    %v493 = vunpack.c.h.b16 %v261
    %v494 = vunpack.c.l.b16 %v262
    %v495 = vunpack.c.l.b16 %v263
    %v496 = vunpack.c.h.b16 %v263
    %v497 = vunpack.c.l.b16 %v264
    %v498 = vunpack.c.l.b16 %v265
    %v499 = vunpack.c.h.b16 %v265
    %v500 = vunpack.c.l.b16 %v266
    %v501 = vunpack.c.l.b16 %v267
    %v502 = vunpack.c.h.b16 %v267
    %v503 = vunpack.c.l.b16 %v268
    %v504 = vunpack.c.l.b16 %v269
    %v505 = vunpack.c.h.b16 %v269
    %v506 = vunpack.c.l.b16 %v270
    %v507 = vunpack.c.l.b16 %v271
    %v508 = vunpack.c.h.b16 %v271
    %v509 = vunpack.c.l.b16 %v272
    %v510 = vunpack.c.l.b16 %v273
    %v511 = vunpack.c.h.b16 %v273
    %v512 = vunpack.c.l.b16 %v274
    %v513 = vunpack.c.l.b16 %v275
    %v514 = vunpack.c.h.b16 %v275
    %v515 = vunpack.c.l.b16 %v276
    %v516 = vunpack.c.l.b16 %v277
    %v517 = vunpack.c.h.b16 %v277
    %v518 = vunpack.c.l.b16 %v278
    %v519 = vunpack.c.l.b16 %v279
    %v520 = vunpack.c.h.b16 %v279
    %v521 = vunpack.c.l.b16 %v280
    %v522 = vunpack.c.l.b16 %v281
    %v523 = vunpack.c.h.b16 %v281
    %v524 = vunpack.c.l.b16 %v282
    %v525 = vunpack.c.l.b16 %v283
    %v526 = vunpack.c.h.b16 %v283
    %v527 = vunpack.c.l.b16 %v284
    %v528 = vunpack.c.l.b16 %v285
    %v529 = vunpack.c.h.b16 %v285
    %v530 = vunpack.c.l.b16 %v286
    %v531 = vunpack.c.l.b16 %v287
    %v532 = vunpack.c.h.b16 %v287
    %v533 = vunpack.c.l.b16 %v288
    %v534 = vunpack.c.l.b16 %v289
    %v535 = vunpack.c.h.b16 %v289
    %v536 = vunpack.c.l.b16 %v290
    %v537 = vunpack.c.l.b16 %v291
    %v538 = vunpack.c.h.b16 %v291
    %v539 = vunpack.c.l.b16 %v292
    %v540 = vunpack.c.l.b16 %v293
    %v541 = vunpack.c.h.b16 %v293
    %v542 = vunpack.c.l.b16 %v294
    %v543 = vunpack.c.l.b16 %v295
    %v544 = vunpack.c.h.b16 %v295
    %v545 = vunpack.c.l.b16 %v296
    %v546 = vunpack.c.l.b16 %v297
    %v547 = vunpack.c.h.b16 %v297
    %v548 = vunpack.c.l.b16 %v298
    %v549 = vunpack.c.l.b16 %v299
    %v550 = vunpack.c.h.b16 %v299
    %v551 = vunpack.c.l.b16 %v300
    %v552 = vunpack.c.l.b16 %v301
    %v553 = vunpack.c.h.b16 %v301
    %v554 = vunpack.c.l.b16 %v302
    %v555 = vunpack.c.l.b16 %v303
    %v556 = vunpack.c.h.b16 %v303
    %v557 = vunpack.c.l.b16 %v304
    %v558 = vunpack.c.l.b16 %v305
    %v559 = vunpack.c.h.b16 %v305
    %v560 = vunpack.c.l.b16 %v306
    %v561 = vunpack.c.l.b16 %v307
    %v562 = vunpack.c.h.b16 %v307
    %v563 = vunpack.c.l.b16 %v308
    %v564 = vunpack.c.l.b16 %v309
    %v565 = vunpack.c.h.b16 %v309
    %v566 = vunpack.c.l.b16 %v310
    %v567 = vunpack.c.l.b16 %v311
    %v568 = vunpack.c.h.b16 %v311
    %v569 = vunpack.c.l.b16 %v312
    %v570 = vpack.c.b16 %v429, %v426
    %v571 = vpack.c.b16 %v430, %v427
    %v572 = vpack.c.b16 %v431, %v428
    %v573 = vpack.c.b16 %v435, %v432
    %v574 = vpack.c.b16 %v436, %v433
    %v575 = vpack.c.b16 %v437, %v434
    %v576 = vpack.c.b16 %v441, %v438
    %v577 = vpack.c.b16 %v442, %v439
    %v578 = vpack.c.b16 %v443, %v440
    %v579 = vpack.c.b16 %v447, %v444
    %v580 = vpack.c.b16 %v448, %v445
    %v581 = vpack.c.b16 %v449, %v446
    %v582 = vpack.c.b16 %v453, %v450
    %v583 = vpack.c.b16 %v454, %v451
    %v584 = vpack.c.b16 %v455, %v452
    %v585 = vpack.c.b16 %v459, %v456
    %v586 = vpack.c.b16 %v460, %v457
    %v587 = vpack.c.b16 %v461, %v458
    %v588 = vpack.c.b16 %v465, %v462
    %v589 = vpack.c.b16 %v466, %v463
    %v590 = vpack.c.b16 %v467, %v464
    %v591 = vpack.c.b16 %v471, %v468
    %v592 = vpack.c.b16 %v472, %v469
    %v593 = vpack.c.b16 %v473, %v470
    %v594 = vpack.c.b16 %v477, %v474
    %v595 = vpack.c.b16 %v478, %v475
    %v596 = vpack.c.b16 %v479, %v476
    %v597 = vpack.c.b16 %v483, %v480
    %v598 = vpack.c.b16 %v484, %v481
    %v599 = vpack.c.b16 %v485, %v482
    %v600 = vpack.c.b16 %v489, %v486
    %v601 = vpack.c.b16 %v490, %v487
    %v602 = vpack.c.b16 %v491, %v488
    %v603 = vpack.c.b16 %v495, %v492
    %v604 = vpack.c.b16 %v496, %v493
    %v605 = vpack.c.b16 %v497, %v494
    %v606 = vpack.c.b16 %v501, %v498
    %v607 = vpack.c.b16 %v502, %v499
    %v608 = vpack.c.b16 %v503, %v500
    %v609 = vpack.c.b16 %v507, %v504
    %v610 = vpack.c.b16 %v508, %v505
    %v611 = vpack.c.b16 %v509, %v506
    %v612 = vpack.c.b16 %v513, %v510
    %v613 = vpack.c.b16 %v514, %v511
    %v614 = vpack.c.b16 %v515, %v512
    %v615 = vpack.c.b16 %v519, %v516
    %v616 = vpack.c.b16 %v520, %v517
    %v617 = vpack.c.b16 %v521, %v518
    %v618 = vpack.c.b16 %v525, %v522
    %v619 = vpack.c.b16 %v526, %v523
    %v620 = vpack.c.b16 %v527, %v524
    %v621 = vpack.c.b16 %v531, %v528
    %v622 = vpack.c.b16 %v532, %v529
    %v623 = vpack.c.b16 %v533, %v530
    %v624 = vpack.c.b16 %v537, %v534
    %v625 = vpack.c.b16 %v538, %v535
    %v626 = vpack.c.b16 %v539, %v536
    %v627 = vpack.c.b16 %v543, %v540
    %v628 = vpack.c.b16 %v544, %v541
    %v629 = vpack.c.b16 %v545, %v542
    %v630 = vpack.c.b16 %v549, %v546
    %v631 = vpack.c.b16 %v550, %v547
    %v632 = vpack.c.b16 %v551, %v548
    %v633 = vpack.c.b16 %v555, %v552
    %v634 = vpack.c.b16 %v556, %v553
    %v635 = vpack.c.b16 %v557, %v554
    %v636 = vpack.c.b16 %v561, %v558
    %v637 = vpack.c.b16 %v562, %v559
    %v638 = vpack.c.b16 %v563, %v560
    %v639 = vpack.c.b16 %v567, %v564
    %v640 = vpack.c.b16 %v568, %v565
    %v641 = vpack.c.b16 %v569, %v566
    %714 = vmatprep.subr.bf16.mxu0 %v571
    %715 = vmatpush1.bf16.msra.mxu0 %v570
    %716 = vmatprep.subr.bf16.mxu0 %v574
    %717 = vmatpush1.bf16.msra.mxu0 %v573
    %718 = vmatprep.subr.bf16.mxu0 %v577
    %719 = vmatpush1.bf16.msra.mxu0 %v576
    %720 = vmatprep.subr.bf16.mxu0 %v580
    %721 = vmatpush1.bf16.msra.mxu0 %v579
    %722 = vmatprep.subr.bf16.mxu0 %v583
    %723 = vmatpush1.bf16.msra.mxu0 %v582
    %724 = vmatprep.subr.bf16.mxu0 %v586
    %725 = vmatpush1.bf16.msra.mxu0 %v585
    %726 = vmatprep.subr.bf16.mxu0 %v589
    %727 = vmatpush1.bf16.msra.mxu0 %v588
    %728 = vmatprep.subr.bf16.mxu0 %v592
    %729 = vmatpush1.bf16.msra.mxu0 %v591
    %730 = vmatprep.subr.bf16.mxu0 %v595
    %731 = vmatpush1.bf16.msra.mxu0 %v594
    %732 = vmatprep.subr.bf16.mxu0 %v598
    %733 = vmatpush1.bf16.msra.mxu0 %v597
    %734 = vmatprep.subr.bf16.mxu0 %v601
    %735 = vmatpush1.bf16.msra.mxu0 %v600
    %736 = vmatprep.subr.bf16.mxu0 %v604
    %737 = vmatpush1.bf16.msra.mxu0 %v603
    %738 = vmatprep.subr.bf16.mxu0 %v607
    %739 = vmatpush1.bf16.msra.mxu0 %v606
    %740 = vmatprep.subr.bf16.mxu0 %v610
    %741 = vmatpush1.bf16.msra.mxu0 %v609
    %742 = vmatprep.subr.bf16.mxu0 %v613
    %743 = vmatpush1.bf16.msra.mxu0 %v612
    %744 = vmatprep.subr.bf16.mxu0 %v616
    %745 = vmatpush1.bf16.msra.mxu0 %v615
    %746 = vmatprep.mubr.bf16.mxu0 %v215
    %747 = vmatmul.mubr.bf16.gmra.mrb[0].mxu0 %v214
    %v748 = vpop.f32.mrb[0].mxu0
    %v749 = vadd.f32 %v318, %v748
    %v750 = vpop.f32.mrb[0].mxu0
    %v751 = vadd.f32 %v322, %v750
    %v752 = vpop.f32.mrb[0].mxu0
    %v753 = vpop.f32.mrb[0].mxu0
    %754 = vdwg.mxu0
    %755 = vmatprep.subr.bf16.mxu0 %v619
    %756 = vmatpush1.bf16.msra.mxu0 %v618
    %757 = vmatprep.subr.bf16.mxu0 %v622
    %758 = vmatpush1.bf16.msra.mxu0 %v621
    %759 = vmatprep.subr.bf16.mxu0 %v625
    %760 = vmatpush1.bf16.msra.mxu0 %v624
    %761 = vmatprep.subr.bf16.mxu0 %v628
    %762 = vmatpush1.bf16.msra.mxu0 %v627
    %763 = vmatprep.subr.bf16.mxu0 %v631
    %764 = vmatpush1.bf16.msra.mxu0 %v630
    %765 = vmatprep.subr.bf16.mxu0 %v634
    %766 = vmatpush1.bf16.msra.mxu0 %v633
    %767 = vmatprep.subr.bf16.mxu0 %v637
    %768 = vmatpush1.bf16.msra.mxu0 %v636
    %769 = vmatprep.subr.bf16.mxu0 %v640
    %770 = vmatpush1.bf16.msra.mxu0 %v639
    %771 = vmatprep.subr.bf16.mxu0 0
    %772 = vmatpush1.bf16.msra.mxu0 0
    %773 = vmatprep.subr.bf16.mxu0 0
    %774 = vmatpush1.bf16.msra.mxu0 0
    %775 = vmatprep.subr.bf16.mxu0 0
    %776 = vmatpush1.bf16.msra.mxu0 0
    %777 = vmatprep.subr.bf16.mxu0 0
    %778 = vmatpush1.bf16.msra.mxu0 0
    %779 = vmatprep.subr.bf16.mxu0 0
    %780 = vmatpush1.bf16.msra.mxu0 0
    %781 = vmatprep.subr.bf16.mxu0 0
    %782 = vmatpush1.bf16.msra.mxu0 0
    %783 = vmatprep.subr.bf16.mxu0 0
    %784 = vmatpush1.bf16.msra.mxu0 0
    %785 = vmatprep.subr.bf16.mxu0 0
    %786 = vmatpush1.bf16.msra.mxu0 0
    %787 = vmatprep.mubr.bf16.mxu0 0
    %788 = vmatmul.mubr.bf16.gmra.mrb[0].mxu0 %v216
    %v789 = vpop.f32.mrb[0].mxu0
    %v790 = vadd.f32 %v749, %v789
    %v791 = vpop.f32.mrb[0].mxu0
    %v792 = vadd.f32 %v751, %v791
    %v793 = vpop.f32.mrb[0].mxu0
    %v794 = vpop.f32.mrb[0].mxu0
    %795 = vdwg.mxu0
    %796 = vmatprep.subr.bf16.mxu0 0
    %797 = vmatpush1.bf16.msra.mxu0 %v572
    %798 = vmatprep.subr.bf16.mxu0 0
    %799 = vmatpush1.bf16.msra.mxu0 %v575
    %800 = vmatprep.subr.bf16.mxu0 0
    %801 = vmatpush1.bf16.msra.mxu0 %v578
    %802 = vmatprep.subr.bf16.mxu0 0
    %803 = vmatpush1.bf16.msra.mxu0 %v581
    %804 = vmatprep.subr.bf16.mxu0 0
    %805 = vmatpush1.bf16.msra.mxu0 %v584
    %806 = vmatprep.subr.bf16.mxu0 0
    %807 = vmatpush1.bf16.msra.mxu0 %v587
    %808 = vmatprep.subr.bf16.mxu0 0
    %809 = vmatpush1.bf16.msra.mxu0 %v590
    %810 = vmatprep.subr.bf16.mxu0 0
    %811 = vmatpush1.bf16.msra.mxu0 %v593
    %812 = vmatprep.subr.bf16.mxu0 0
    %813 = vmatpush1.bf16.msra.mxu0 %v596
    %814 = vmatprep.subr.bf16.mxu0 0
    %815 = vmatpush1.bf16.msra.mxu0 %v599
    %816 = vmatprep.subr.bf16.mxu0 0
    %817 = vmatpush1.bf16.msra.mxu0 %v602
    %818 = vmatprep.subr.bf16.mxu0 0
    %819 = vmatpush1.bf16.msra.mxu0 %v605
    %820 = vmatprep.subr.bf16.mxu0 0
    %821 = vmatpush1.bf16.msra.mxu0 %v608
    %822 = vmatprep.subr.bf16.mxu0 0
    %823 = vmatpush1.bf16.msra.mxu0 %v611
    %824 = vmatprep.subr.bf16.mxu0 0
    %825 = vmatpush1.bf16.msra.mxu0 %v614
    %826 = vmatprep.subr.bf16.mxu0 0
    %827 = vmatpush1.bf16.msra.mxu0 %v617
    %828 = vmatprep.mubr.bf16.mxu0 %v215
    %829 = vmatmul.mubr.bf16.gmra.mrb[0].mxu0 %v214
    %v830 = vpop.f32.mrb[0].mxu0
    %v831 = vadd.f32 %v326, %v830
    %v832 = vpop.f32.mrb[0].mxu0
    %v833 = vpop.f32.mrb[0].mxu0
    %v834 = vpop.f32.mrb[0].mxu0
    %835 = vdwg.mxu0
    %836 = vmatprep.subr.bf16.mxu0 0
    %837 = vmatpush1.bf16.msra.mxu0 %v620
    %838 = vmatprep.subr.bf16.mxu0 0
    %839 = vmatpush1.bf16.msra.mxu0 %v623
    %840 = vmatprep.subr.bf16.mxu0 0
    %841 = vmatpush1.bf16.msra.mxu0 %v626
    %842 = vmatprep.subr.bf16.mxu0 0
    %843 = vmatpush1.bf16.msra.mxu0 %v629
    %844 = vmatprep.subr.bf16.mxu0 0
    %845 = vmatpush1.bf16.msra.mxu0 %v632
    %846 = vmatprep.subr.bf16.mxu0 0
    %847 = vmatpush1.bf16.msra.mxu0 %v635
    %848 = vmatprep.subr.bf16.mxu0 0
    %849 = vmatpush1.bf16.msra.mxu0 %v638
    %850 = vmatprep.subr.bf16.mxu0 0
    %851 = vmatpush1.bf16.msra.mxu0 %v641
    %852 = vmatprep.subr.bf16.mxu0 0
    %853 = vmatpush1.bf16.msra.mxu0 0
    %854 = vmatprep.subr.bf16.mxu0 0
    %855 = vmatpush1.bf16.msra.mxu0 0
    %856 = vmatprep.subr.bf16.mxu0 0
    %857 = vmatpush1.bf16.msra.mxu0 0
    %858 = vmatprep.subr.bf16.mxu0 0
    %859 = vmatpush1.bf16.msra.mxu0 0
    %860 = vmatprep.subr.bf16.mxu0 0
    %861 = vmatpush1.bf16.msra.mxu0 0
    %862 = vmatprep.subr.bf16.mxu0 0
    %863 = vmatpush1.bf16.msra.mxu0 0
    %864 = vmatprep.subr.bf16.mxu0 0
    %865 = vmatpush1.bf16.msra.mxu0 0
    %866 = vmatprep.subr.bf16.mxu0 0
    %867 = vmatpush1.bf16.msra.mxu0 0
    %868 = vmatprep.mubr.bf16.mxu0 0
    %869 = vmatmul.mubr.bf16.gmra.mrb[0].mxu0 %v216
    %v870 = vpop.f32.mrb[0].mxu0
    %v871 = vadd.f32 %v831, %v870
    %v872 = vpop.f32.mrb[0].mxu0
    %v873 = vpop.f32.mrb[0].mxu0
    %v874 = vpop.f32.mrb[0].mxu0
    %875 = vdwg.mxu0
    %v876 = vmax.f32 %v790, 0.0
    %v877 = vmax.f32 %v792, 0.0
    %v878 = vmax.f32 %v871, 0.0
    %v879 = vpack.c.bf16 %v876, %v876
    %v880 = vpack.c.bf16 %v877, %v877
    %v881 = vpack.c.bf16 %v878, %v878
    %v882 = vld [vmem:[#allocation6] sm:$0xf]
    %v883 = vld [vmem:[#allocation6 + $0x4] sm:$0xf]
    %v884 = vld [vmem:[#allocation6 + $0x8] sm:$0xf]
    %v885 = vld [vmem:[#allocation6 + $0xc] sm:$0xf]
    %v886 = vld [vmem:[#allocation6 + $0x10] sm:$0xf]
    %v887 = vld [vmem:[#allocation6 + $0x14] sm:$0xf]
    %v888 = vld [vmem:[#allocation6 + $0x18] sm:$0xf]
    %v889 = vld [vmem:[#allocation6 + $0x1c] sm:$0xf]
    %v890 = vld [vmem:[#allocation6 + $0x20] sm:$0xf]
    %v891 = vld [vmem:[#allocation6 + $0x24] sm:$0xf]
    %v892 = vld [vmem:[#allocation6 + $0x28] sm:$0xf]
    %v893 = vld [vmem:[#allocation6 + $0x2c] sm:$0xf]
    %v894 = vld [vmem:[#allocation6 + $0x30] sm:$0xf]
    %v895 = vld [vmem:[#allocation6 + $0x34] sm:$0xf]
    %v896 = vld [vmem:[#allocation6 + $0x38] sm:$0xf]
    %v897 = vld [vmem:[#allocation6 + $0x3c] sm:$0xf]
    %v898 = vld [vmem:[#allocation6 + $0x40] sm:$0xf]
    %v899 = vld [vmem:[#allocation6 + $0x44] sm:$0xf]
    %v900 = vld [vmem:[#allocation6 + $0x48] sm:$0xf]
    %v901 = vld [vmem:[#allocation6 + $0x4c] sm:$0xf]
    %v902 = vld [vmem:[#allocation6 + $0x50] sm:$0xf]
    %v903 = vld [vmem:[#allocation6 + $0x54] sm:$0xf]
    %v904 = vld [vmem:[#allocation6 + $0x58] sm:$0xf]
    %v905 = vld [vmem:[#allocation6 + $0x5c] sm:$0xf]
    %v906 = vld [vmem:[#allocation6 + $0x60] sm:$0xf]
    %v907 = vld [vmem:[#allocation6 + $0x64] sm:$0xf]
    %v908 = vld [vmem:[#allocation6 + $0x68] sm:$0xf]
    %v909 = vld [vmem:[#allocation6 + $0x6c] sm:$0xf]
    %v910 = vld [vmem:[#allocation6 + $0x70] sm:$0xf]
    %v911 = vld [vmem:[#allocation6 + $0x74] sm:$0xf]
    %v912 = vld [vmem:[#allocation6 + $0x78] sm:$0xf]
    %v913 = vld [vmem:[#allocation6 + $0x7c] sm:$0xf]
    %v914 = vld [vmem:[#allocation6 + $0x80] sm:$0xf]
    %v915 = vld [vmem:[#allocation6 + $0x84] sm:$0xf]
    %v916 = vld [vmem:[#allocation6 + $0x88] sm:$0xf]
    %v917 = vld [vmem:[#allocation6 + $0x8c] sm:$0xf]
    %v918 = vld [vmem:[#allocation6 + $0x90] sm:$0xf]
    %v919 = vld [vmem:[#allocation6 + $0x94] sm:$0xf]
    %v920 = vld [vmem:[#allocation6 + $0x98] sm:$0xf]
    %v921 = vld [vmem:[#allocation6 + $0x9c] sm:$0xf]
    %v922 = vld [vmem:[#allocation6 + $0xa0] sm:$0xf]
    %v923 = vld [vmem:[#allocation6 + $0xa4] sm:$0xf]
    %v924 = vld [vmem:[#allocation6 + $0xa8] sm:$0xf]
    %v925 = vld [vmem:[#allocation6 + $0xac] sm:$0xf]
    %v926 = vld [vmem:[#allocation6 + $0xb0] sm:$0xf]
    %v927 = vld [vmem:[#allocation6 + $0xb4] sm:$0xf]
    %v928 = vld [vmem:[#allocation6 + $0xb8] sm:$0xf]
    %v929 = vld [vmem:[#allocation6 + $0xbc] sm:$0xf]
    %v930 = vld [vmem:[%s6] sm:$0x1]
    %v932 = vlaneseq
    %v933 = vshrl.u32 %v932, 7
    %v934 = vsub.s32 0, %v933
    %v935 = vrot.slane %v930, %v934
    %v985 = vunpack.c.l.b16 %v882
    %v986 = vunpack.c.l.b16 %v883
    %v987 = vunpack.c.l.b16 %v884
    %v988 = vunpack.c.l.b16 %v885
    %v989 = vunpack.c.l.b16 %v886
    %v990 = vunpack.c.l.b16 %v887
    %v991 = vunpack.c.l.b16 %v888
    %v992 = vunpack.c.l.b16 %v889
    %v993 = vunpack.c.l.b16 %v890
    %v994 = vunpack.c.l.b16 %v891
    %v995 = vunpack.c.l.b16 %v892
    %v996 = vunpack.c.l.b16 %v893
    %v997 = vunpack.c.l.b16 %v894
    %v998 = vunpack.c.l.b16 %v895
    %v999 = vunpack.c.l.b16 %v896
    %v1000 = vunpack.c.l.b16 %v897
    %v1001 = vunpack.c.l.b16 %v898
    %v1002 = vunpack.c.l.b16 %v899
    %v1003 = vunpack.c.l.b16 %v900
    %v1004 = vunpack.c.l.b16 %v901
    %v1005 = vunpack.c.l.b16 %v902
    %v1006 = vunpack.c.l.b16 %v903
    %v1007 = vunpack.c.l.b16 %v904
    %v1008 = vunpack.c.l.b16 %v905
    %v1009 = vunpack.c.l.b16 %v906
    %v1010 = vunpack.c.l.b16 %v907
    %v1011 = vunpack.c.l.b16 %v908
    %v1012 = vunpack.c.l.b16 %v909
    %v1013 = vunpack.c.l.b16 %v910
    %v1014 = vunpack.c.l.b16 %v911
    %v1015 = vunpack.c.l.b16 %v912
    %v1016 = vunpack.c.l.b16 %v913
    %v1017 = vunpack.c.l.b16 %v914
    %v1018 = vunpack.c.l.b16 %v915
    %v1019 = vunpack.c.l.b16 %v916
    %v1020 = vunpack.c.l.b16 %v917
    %v1021 = vunpack.c.l.b16 %v918
    %v1022 = vunpack.c.l.b16 %v919
    %v1023 = vunpack.c.l.b16 %v920
    %v1024 = vunpack.c.l.b16 %v921
    %v1025 = vunpack.c.l.b16 %v922
    %v1026 = vunpack.c.l.b16 %v923
    %v1027 = vunpack.c.l.b16 %v924
    %v1028 = vunpack.c.l.b16 %v925
    %v1029 = vunpack.c.l.b16 %v926
    %v1030 = vunpack.c.l.b16 %v927
    %v1031 = vunpack.c.l.b16 %v928
    %v1032 = vunpack.c.l.b16 %v929
    %v1033 = vpack.c.b16 %v986, %v985
    %v1034 = vpack.c.b16 %v988, %v987
    %v1035 = vpack.c.b16 %v990, %v989
    %v1036 = vpack.c.b16 %v992, %v991
    %v1037 = vpack.c.b16 %v994, %v993
    %v1038 = vpack.c.b16 %v996, %v995
    %v1039 = vpack.c.b16 %v998, %v997
    %v1040 = vpack.c.b16 %v1000, %v999
    %v1041 = vpack.c.b16 %v1002, %v1001
    %v1042 = vpack.c.b16 %v1004, %v1003
    %v1043 = vpack.c.b16 %v1006, %v1005
    %v1044 = vpack.c.b16 %v1008, %v1007
    %v1045 = vpack.c.b16 %v1010, %v1009
    %v1046 = vpack.c.b16 %v1012, %v1011
    %v1047 = vpack.c.b16 %v1014, %v1013
    %v1048 = vpack.c.b16 %v1016, %v1015
    %v1049 = vpack.c.b16 %v1018, %v1017
    %v1050 = vpack.c.b16 %v1020, %v1019
    %v1051 = vpack.c.b16 %v1022, %v1021
    %v1052 = vpack.c.b16 %v1024, %v1023
    %v1053 = vpack.c.b16 %v1026, %v1025
    %v1054 = vpack.c.b16 %v1028, %v1027
    %v1055 = vpack.c.b16 %v1030, %v1029
    %v1056 = vpack.c.b16 %v1032, %v1031
    %1081 = vmatprep.subr.bf16.mxu0 0
    %1082 = vmatpush1.bf16.msra.mxu0 %v1033
    %1083 = vmatprep.subr.bf16.mxu0 0
    %1084 = vmatpush1.bf16.msra.mxu0 %v1034
    %1085 = vmatprep.subr.bf16.mxu0 0
    %1086 = vmatpush1.bf16.msra.mxu0 %v1035
    %1087 = vmatprep.subr.bf16.mxu0 0
    %1088 = vmatpush1.bf16.msra.mxu0 %v1036
    %1089 = vmatprep.subr.bf16.mxu0 0
    %1090 = vmatpush1.bf16.msra.mxu0 %v1037
    %1091 = vmatprep.subr.bf16.mxu0 0
    %1092 = vmatpush1.bf16.msra.mxu0 %v1038
    %1093 = vmatprep.subr.bf16.mxu0 0
    %1094 = vmatpush1.bf16.msra.mxu0 %v1039
    %1095 = vmatprep.subr.bf16.mxu0 0
    %1096 = vmatpush1.bf16.msra.mxu0 %v1040
    %1097 = vmatprep.subr.bf16.mxu0 0
    %1098 = vmatpush1.bf16.msra.mxu0 %v1041
    %1099 = vmatprep.subr.bf16.mxu0 0
    %1100 = vmatpush1.bf16.msra.mxu0 %v1042
    %1101 = vmatprep.subr.bf16.mxu0 0
    %1102 = vmatpush1.bf16.msra.mxu0 %v1043
    %1103 = vmatprep.subr.bf16.mxu0 0
    %1104 = vmatpush1.bf16.msra.mxu0 %v1044
    %1105 = vmatprep.subr.bf16.mxu0 0
    %1106 = vmatpush1.bf16.msra.mxu0 %v1045
    %1107 = vmatprep.subr.bf16.mxu0 0
    %1108 = vmatpush1.bf16.msra.mxu0 %v1046
    %1109 = vmatprep.subr.bf16.mxu0 0
    %1110 = vmatpush1.bf16.msra.mxu0 %v1047
    %1111 = vmatprep.subr.bf16.mxu0 0
    %1112 = vmatpush1.bf16.msra.mxu0 %v1048
    %1113 = vmatprep.mubr.bf16.mxu0 %v880
    %1114 = vmatmul.mubr.bf16.gmra.mrb[0].mxu0 %v879
    %v1115 = vpop.f32.mrb[0].mxu0
    %v1116 = vadd.f32 %v935, %v1115
    %v1117 = vpop.f32.mrb[0].mxu0
    %v1118 = vpop.f32.mrb[0].mxu0
    %v1119 = vpop.f32.mrb[0].mxu0
    %1120 = vdwg.mxu0
    %1121 = vmatprep.subr.bf16.mxu0 0
    %1122 = vmatpush1.bf16.msra.mxu0 %v1049
    %1123 = vmatprep.subr.bf16.mxu0 0
    %1124 = vmatpush1.bf16.msra.mxu0 %v1050
    %1125 = vmatprep.subr.bf16.mxu0 0
    %1126 = vmatpush1.bf16.msra.mxu0 %v1051
    %1127 = vmatprep.subr.bf16.mxu0 0
    %1128 = vmatpush1.bf16.msra.mxu0 %v1052
    %1129 = vmatprep.subr.bf16.mxu0 0
    %1130 = vmatpush1.bf16.msra.mxu0 %v1053
    %1131 = vmatprep.subr.bf16.mxu0 0
    %1132 = vmatpush1.bf16.msra.mxu0 %v1054
    %1133 = vmatprep.subr.bf16.mxu0 0
    %1134 = vmatpush1.bf16.msra.mxu0 %v1055
    %1135 = vmatprep.subr.bf16.mxu0 0
    %1136 = vmatpush1.bf16.msra.mxu0 %v1056
    %1137 = vmatprep.subr.bf16.mxu0 0
    %1138 = vmatpush1.bf16.msra.mxu0 0
    %1139 = vmatprep.subr.bf16.mxu0 0
    %1140 = vmatpush1.bf16.msra.mxu0 0
    %1141 = vmatprep.subr.bf16.mxu0 0
    %1142 = vmatpush1.bf16.msra.mxu0 0
    %1143 = vmatprep.subr.bf16.mxu0 0
    %1144 = vmatpush1.bf16.msra.mxu0 0
    %1145 = vmatprep.subr.bf16.mxu0 0
    %1146 = vmatpush1.bf16.msra.mxu0 0
    %1147 = vmatprep.subr.bf16.mxu0 0
    %1148 = vmatpush1.bf16.msra.mxu0 0
    %1149 = vmatprep.subr.bf16.mxu0 0
    %1150 = vmatpush1.bf16.msra.mxu0 0
    %1151 = vmatprep.subr.bf16.mxu0 0
    %1152 = vmatpush1.bf16.msra.mxu0 0
    %1153 = vmatprep.mubr.bf16.mxu0 0
    %1154 = vmatmul.mubr.bf16.gmra.mrb[0].mxu0 %v881
    %v1155 = vpop.f32.mrb[0].mxu0
    %v1156 = vadd.f32 %v1116, %v1155
    %v1157 = vpop.f32.mrb[0].mxu0
    %v1158 = vpop.f32.mrb[0].mxu0
    %v1159 = vpop.f32.mrb[0].mxu0
    %1160 = vdwg.mxu0
    %vm1161 = vcmp.gt.f32.partialorder %v1156, 0.0
    %v1162 = vsel %vm1161, 1, 0
    %v1163 = vcvt.s32.f32 %v1162
    %v1164 = vld [vmem:[#allocation7] sm:$0xff]
    %v1165 = vld [vmem:[#allocation7 + $0x8] sm:$0xff]
    %v1166 = vld [vmem:[#allocation7 + $0x10] sm:$0xff]
    %v1167 = vld [vmem:[#allocation7 + $0x18] sm:$0xff]
    %v1168 = vld [vmem:[#allocation7 + $0x20] sm:$0xff]
    %v1169 = vld [vmem:[#allocation7 + $0x28] sm:$0xff]
    %v1170 = vld [vmem:[#allocation7 + $0x30] sm:$0xff]
    %v1171 = vld [vmem:[#allocation7 + $0x38] sm:$0xff]
    %v1172 = vld [vmem:[#allocation7 + $0x40] sm:$0xff]
    %v1173 = vld [vmem:[#allocation7 + $0x48] sm:$0xff]
    %v1174 = vld [vmem:[#allocation7 + $0x50] sm:$0xff]
    %v1175 = vld [vmem:[#allocation7 + $0x58] sm:$0xff]
    %v1176 = vld [vmem:[#allocation7 + $0x60] sm:$0xff]
    %v1177 = vld [vmem:[#allocation7 + $0x68] sm:$0xff]
    %v1178 = vld [vmem:[#allocation7 + $0x70] sm:$0xff]
    %v1179 = vld [vmem:[#allocation7 + $0x78] sm:$0xff]
    %v1180 = vld [vmem:[%s8] sm:$0x1]
    %v1182 = vlaneseq
    %v1183 = vshrl.u32 %v1182, 7
    %v1184 = vsub.s32 0, %v1183
    %v1185 = vrot.slane %v1180, %v1184
    %1187 = vmatprep.subr.mxu0 0.0
    %1188 = vmatpush1.msra.mxu0 %v1164
    %1189 = vmatprep.subr.mxu0 0.0
    %1190 = vmatpush1.msra.mxu0 %v1165
    %1191 = vmatprep.subr.mxu0 0.0
    %1192 = vmatpush1.msra.mxu0 %v1166
    %1193 = vmatprep.subr.mxu0 0.0
    %1194 = vmatpush1.msra.mxu0 %v1167
    %1195 = vmatprep.subr.mxu0 0.0
    %1196 = vmatpush1.msra.mxu0 %v1168
    %1197 = vmatprep.subr.mxu0 0.0
    %1198 = vmatpush1.msra.mxu0 %v1169
    %1199 = vmatprep.subr.mxu0 0.0
    %1200 = vmatpush1.msra.mxu0 %v1170
    %1201 = vmatprep.subr.mxu0 0.0
    %1202 = vmatpush1.msra.mxu0 %v1171
    %1203 = vmatprep.subr.mxu0 0.0
    %1204 = vmatpush1.msra.mxu0 %v1172
    %1205 = vmatprep.subr.mxu0 0.0
    %1206 = vmatpush1.msra.mxu0 %v1173
    %1207 = vmatprep.subr.mxu0 0.0
    %1208 = vmatpush1.msra.mxu0 %v1174
    %1209 = vmatprep.subr.mxu0 0.0
    %1210 = vmatpush1.msra.mxu0 %v1175
    %1211 = vmatprep.subr.mxu0 0.0
    %1212 = vmatpush1.msra.mxu0 %v1176
    %1213 = vmatprep.subr.mxu0 0.0
    %1214 = vmatpush1.msra.mxu0 %v1177
    %1215 = vmatprep.subr.mxu0 0.0
    %1216 = vmatpush1.msra.mxu0 %v1178
    %1217 = vmatprep.subr.mxu0 0.0
    %1218 = vmatpush1.msra.mxu0 %v1179
    %1219 = vmatprep.subr.mxu0 0.0
    %1220 = vmatpush1.msra.mxu0 0.0
    %1221 = vmatprep.subr.mxu0 0.0
    %1222 = vmatpush1.msra.mxu0 0.0
    %1223 = vmatprep.subr.mxu0 0.0
    %1224 = vmatpush1.msra.mxu0 0.0
    %1225 = vmatprep.subr.mxu0 0.0
    %1226 = vmatpush1.msra.mxu0 0.0
    %1227 = vmatprep.subr.mxu0 0.0
    %1228 = vmatpush1.msra.mxu0 0.0
    %1229 = vmatprep.subr.mxu0 0.0
    %1230 = vmatpush1.msra.mxu0 0.0
    %1231 = vmatprep.subr.mxu0 0.0
    %1232 = vmatpush1.msra.mxu0 0.0
    %1233 = vmatprep.subr.mxu0 0.0
    %1234 = vmatpush1.msra.mxu0 0.0
    %1235 = vmatprep.subr.mxu0 0.0
    %1236 = vmatpush1.msra.mxu0 0.0
    %1237 = vmatprep.subr.mxu0 0.0
    %1238 = vmatpush1.msra.mxu0 0.0
    %1239 = vmatprep.subr.mxu0 0.0
    %1240 = vmatpush1.msra.mxu0 0.0
    %1241 = vmatprep.subr.mxu0 0.0
    %1242 = vmatpush1.msra.mxu0 0.0
    %1243 = vmatprep.subr.mxu0 0.0
    %1244 = vmatpush1.msra.mxu0 0.0
    %1245 = vmatprep.subr.mxu0 0.0
    %1246 = vmatpush1.msra.mxu0 0.0
    %1247 = vmatprep.subr.mxu0 0.0
    %1248 = vmatpush1.msra.mxu0 0.0
    %1249 = vmatprep.subr.mxu0 0.0
    %1250 = vmatpush1.msra.mxu0 0.0
    %1251 = vmatprep.mubr.f32.mxu0 0.0
    %1252 = vmatmul.mubr.f32.gmra.mrb[0].mxu0 %v1163
    %v1253 = vpop.f32.mrb[0].mxu0
    %v1254 = vadd.f32 %v1185, %v1253
    %v1255 = vpop.f32.mrb[0].mxu0
    %1256 = vdwg.mxu0
    %1257 = vst [vmem:[%s9] sm:$0xff] %v1254
    // Predicated region
    $region54: #{rand_net_adv_forward.1} parent=1 // pred_check
      _
    $region55: #{rand_net_adv_forward.1} parent=1 // pred_check_branch
      %1259 = sbr.rel (0) target = $region57
    $region56: #{rand_net_adv_forward.1} parent=1 // pred_region
      _
    $region57: #{rand_net_adv_forward.1} parent=1 // pred_fallthru
      _
    // Predicated region
    $region58: #{rand_net_adv_forward.1} parent=1 // pred_check
      _
    $region59: #{rand_net_adv_forward.1} parent=1 // pred_check_branch
      %1261 = sbr.rel (0) target = $region61
    $region60: #{rand_net_adv_forward.1} parent=1 // pred_region
      _
    $region61: #{rand_net_adv_forward.1} parent=1 // pred_fallthru
      _
    %1262 = vsyncpa [#allocation3], 1
    %1263 = vsyncpa [#allocation5], 1
    %1264 = vsyncpa [#allocation8], 1

</llo_original>
